<compile_context>
chip_gen: v7x
topology: tpu7x:2x2x1
jax: 0.10.0
libtpu: 0.0.40
codegen_flags: <defaults>
</compile_context>

<pallas_src>
import functools

import jax
import jax.numpy as jnp
from jax.experimental import pallas as pl
from jax.experimental.pallas import tpu as pltpu

HP = jax.lax.Precision.HIGHEST


# ---------------------------------------------------------------------------
# Stage 1: LayerNorm(c_m) + linear_1 / linear_2 + mask
#   grid = (N_seq, N_res // TR); outputs a, b as bf16 [N_seq, N_res, C_hidden]
# ---------------------------------------------------------------------------
def _proj_kernel(m_ref, msk_ref, g_ref, beta_ref, w1_ref, b1_ref, w2_ref,
                 b2_ref, a_ref, b_ref):
    x = m_ref[0]                                        # (TR, C_m) f32
    mu = jnp.mean(x, axis=-1, keepdims=True)
    xc = x - mu
    var = jnp.mean(xc * xc, axis=-1, keepdims=True)
    xn = xc * jax.lax.rsqrt(var + 1e-5)                 # torch LayerNorm eps
    xn = xn * g_ref[...] + beta_ref[...]
    msk = msk_ref[0]                                    # (TR, 1)
    av = (jnp.dot(xn, w1_ref[...], preferred_element_type=jnp.float32)
          + b1_ref[...]) * msk
    bv = (jnp.dot(xn, w2_ref[...], preferred_element_type=jnp.float32)
          + b2_ref[...]) * msk
    a_ref[0] = av.astype(a_ref.dtype)                   # bf16 for the MXU
    b_ref[0] = bv.astype(b_ref.dtype)


# ---------------------------------------------------------------------------
# Stage 2: outer-product mean + linear_out + mask normalization
#   per res_i tile:
#     O[(ii*H+c),(j*H+e)] = sum_s a[s,i,c] b[s,j,e]          (1 MXU matmul)
#     out[(ii,j),z] = (O regrouped to (c*H+e) cols) @ w_out + b_out
#     out /= eps + sum_s mask[s,i] mask[s,j]                 ((TI,R) norm)
# ---------------------------------------------------------------------------
def _opm_kernel(a_ref, b_ref, w_ref, bias_ref, mt_ref, mk_ref, o_ref, *, eps):
    S, TI, H = a_ref.shape
    R = mk_ref.shape[1]
    Cz = bias_ref.shape[1]

    A = a_ref[...].reshape(S, TI * H)                   # bf16 [s, ii*H + c]
    B = b_ref[...]                                      # bf16 [s, j*H + e]
    # Single S-contraction on the MXU (lhs contracted on dim 0).
    O = jax.lax.dot_general(A, B, (((0,), (0,)), ((), ())),
                            preferred_element_type=jnp.float32)  # (TI*H, R*H)

    # Regroup rows (ii, c) x cols (j, e)  ->  rows (ii, j) x cols (c*H + e).
    O3 = O.reshape(TI, H, R * H)
    Of = jnp.concatenate(
        [O3[:, c, :].reshape(TI * R, H) for c in range(H)], axis=1)  # (TI*R, H*H)

    P = jnp.dot(Of, w_ref[...],
                preferred_element_type=jnp.float32) + bias_ref[...]  # (TI*R, Cz)

    # Mask normalization: only (TI, R) distinct values; EUP reciprocal.
    norm = jnp.dot(mt_ref[...], mk_ref[...],
                   preferred_element_type=jnp.float32)               # (TI, R)
    inv = pl.reciprocal(eps + norm, approx=True).reshape(TI * R, 1)

    o_ref[...] = (P * inv).reshape(TI, R * Cz).astype(o_ref.dtype)


# ---------------------------------------------------------------------------
# Wrapper
# ---------------------------------------------------------------------------
def outer_product_mean(m, mask, params, *, eps=1e-3, tile_res=8,
                       tile_res_stage1=None):
    S, R, Cm = m.shape
    H = params["w1"].shape[1]
    Cz = params["w_out"].shape[1]

    TI = min(tile_res, R)
    TR = R if tile_res_stage1 is None else min(tile_res_stage1, R)
    if R % TI != 0 or TI % 8 != 0:
        raise ValueError(f"N_res={R} must be divisible by tile_res={TI} (mult of 8)")
    if R % TR != 0 or TR % 8 != 0:
        raise ValueError(f"N_res={R} must be divisible by stage-1 tile={TR}")

    # ---- stage 1: layernorm + projections + mask ----
    a3, b3 = pl.pallas_call(
        _proj_kernel,
        out_shape=(jax.ShapeDtypeStruct((S, R, H), jnp.bfloat16),
                   jax.ShapeDtypeStruct((S, R, H), jnp.bfloat16)),
        grid=(S, R // TR),
        in_specs=[
            pl.BlockSpec((1, TR, Cm), lambda s, r: (s, r, 0)),   # m
            pl.BlockSpec((1, TR, 1), lambda s, r: (s, r, 0)),    # mask
            pl.BlockSpec((1, Cm), lambda s, r: (0, 0)),          # gamma
            pl.BlockSpec((1, Cm), lambda s, r: (0, 0)),          # beta
            pl.BlockSpec((Cm, H), lambda s, r: (0, 0)),          # w1
            pl.BlockSpec((1, H), lambda s, r: (0, 0)),           # b1
            pl.BlockSpec((Cm, H), lambda s, r: (0, 0)),          # w2
            pl.BlockSpec((1, H), lambda s, r: (0, 0)),           # b2
        ],
        out_specs=(pl.BlockSpec((1, TR, H), lambda s, r: (s, r, 0)),
                   pl.BlockSpec((1, TR, H), lambda s, r: (s, r, 0))),
        compiler_params=pltpu.CompilerParams(
            dimension_semantics=("parallel", "parallel")),
    )(m, mask.reshape(S, R, 1),
      params["gamma"].reshape(1, Cm), params["beta"].reshape(1, Cm),
      params["w1"], params["b1"].reshape(1, H),
      params["w2"], params["b2"].reshape(1, H))

    # Free row-major reshape (no transpose, no copy of substance).
    b2 = b3.reshape(S, R * H)                  # [s, j*H + e]
    mask_t = jnp.transpose(mask, (1, 0))       # (R, S) -- tiny

    # ---- stage 2: outer product mean + projection + normalization ----
    out_flat = pl.pallas_call(
        functools.partial(_opm_kernel, eps=eps),
        out_shape=jax.ShapeDtypeStruct((R, R * Cz), jnp.float32),
        grid=(R // TI,),
        in_specs=[
            pl.BlockSpec((S, TI, H), lambda i: (0, i, 0)),       # a tile
            pl.BlockSpec((S, R * H), lambda i: (0, 0)),          # b (full)
            pl.BlockSpec((H * H, Cz), lambda i: (0, 0)),         # w_out
            pl.BlockSpec((1, Cz), lambda i: (0, 0)),             # b_out
            pl.BlockSpec((TI, S), lambda i: (i, 0)),             # mask^T tile
            pl.BlockSpec((S, R), lambda i: (0, 0)),              # mask (full)
        ],
        out_specs=pl.BlockSpec((TI, R * Cz), lambda i: (i, 0)),
        compiler_params=pltpu.CompilerParams(
            dimension_semantics=("parallel",)),
    )(a3, b2, params["w_out"], params["b_out"].reshape(1, Cz), mask_t, mask)

    return out_flat.reshape(R, R, Cz)


# ---------------------------------------------------------------------------
# Pure-JAX reference (mirrors the PyTorch forward exactly, f32 HIGHEST)
# ---------------------------------------------------------------------------
def reference_opm(m, mask, params, eps=1e-3):
    mu = jnp.mean(m, axis=-1, keepdims=True)
    var = jnp.mean((m - mu) ** 2, axis=-1, keepdims=True)
    ln = (m - mu) / jnp.sqrt(var + 1e-5) * params["gamma"] + params["beta"]
    msk = mask[..., None]
    a = (jnp.einsum("src,ch->srh", ln, params["w1"], precision=HP)
         + params["b1"]) * msk
    b = (jnp.einsum("src,ch->srh", ln, params["w2"], precision=HP)
         + params["b2"]) * msk
    a = jnp.swapaxes(a, 0, 1)                   # (R, S, H)
    b = jnp.swapaxes(b, 0, 1)
    outer = jnp.einsum("bac,dae->bdce", a, b, precision=HP)
    outer = outer.reshape(outer.shape[:-2] + (-1,))
    outer = jnp.einsum("ijk,kz->ijz", outer, params["w_out"],
                       precision=HP) + params["b_out"]
    norm = jnp.einsum("abc,adc->bdc", msk, msk, precision=HP)
    return outer / (eps + norm)


if __name__ == "__main__":
    # Small shapes consistent with the module: N_seq=8, N_res=16, c_m=32,
    # c_hidden=8, c_z=16
    S, R, Cm, H, Cz = 8, 16, 32, 8, 16
    key = jax.random.PRNGKey(0)
    ks = jax.random.split(key, 10)
    params = {
        "gamma": 1.0 + 0.02 * jax.random.normal(ks[0], (Cm,), jnp.float32),
        "beta": 0.02 * jax.random.normal(ks[1], (Cm,), jnp.float32),
        "w1": jax.random.normal(ks[2], (Cm, H), jnp.float32) / jnp.sqrt(Cm),
        "b1": 0.1 * jax.random.normal(ks[3], (H,), jnp.float32),
        "w2": jax.random.normal(ks[4], (Cm, H), jnp.float32) / jnp.sqrt(Cm),
        "b2": 0.1 * jax.random.normal(ks[5], (H,), jnp.float32),
        # linear_out uses init='final' (zeros) in the real module; small random
        # weights here so the synthetic test actually exercises it.
        "w_out": 0.05 * jax.random.normal(ks[6], (H * H, Cz), jnp.float32),
        "b_out": 0.05 * jax.random.normal(ks[7], (Cz,), jnp.float32),
    }
    m = jax.random.normal(ks[8], (S, R, Cm), jnp.float32)
    mask = (jax.random.uniform(ks[9], (S, R)) > 0.2).astype(jnp.float32)

    # TODO(synk): optional chunk_size path (pure memory optimization, identical
    # semantics) and leading batch dims are not implemented in this wrapper.
    out = jax.block_until_ready(outer_product_mean(m, mask, params))
    ref = jax.block_until_ready(reference_opm(m, mask, params))

    assert out.shape == (R, R, Cz), out.shape
    # a/b feed the MXU in bf16 (f32 accumulation), so compare at bf16 tolerance.
    assert jnp.allclose(out, ref, atol=3e-2, rtol=3e-2), \
        float(jnp.max(jnp.abs(out - ref)))
    print("KERNEL_OK")
</pallas_src>

<mosaic_0001>
module attributes {stable_mosaic.version = 11 : i64} {
  func.func @_proj_kernel(%arg0: i32, %arg1: i32, %arg2: memref<1x16x32xf32, #tpu.memory_space<vmem>>, %arg3: memref<1x16x1xf32, #tpu.memory_space<vmem>>, %arg4: memref<1x32xf32, #tpu.memory_space<vmem>>, %arg5: memref<1x32xf32, #tpu.memory_space<vmem>>, %arg6: memref<32x8xf32, #tpu.memory_space<vmem>>, %arg7: memref<1x8xf32, #tpu.memory_space<vmem>>, %arg8: memref<32x8xf32, #tpu.memory_space<vmem>>, %arg9: memref<1x8xf32, #tpu.memory_space<vmem>>, %arg10: memref<1x16x8xbf16, #tpu.memory_space<vmem>>, %arg11: memref<1x16x8xbf16, #tpu.memory_space<vmem>>) attributes {dimension_semantics = [#tpu.dimension_semantics<parallel>, #tpu.dimension_semantics<parallel>], iteration_bounds = array<i64: 8, 1>, scalar_prefetch = 0 : i64, scratch_operands = 0 : i64, tpu.core_type = #tpu.core_type<tc>, window_params = [{transform_indices = @transform_0, window_bounds = array<i64: 1, 16, 32>}, {transform_indices = @transform_1, window_bounds = array<i64: 1, 16, 1>}, {pipeline_mode = #tpu.pipeline_mode<synchronous>, transform_indices = @transform_2, window_bounds = array<i64: 1, 32>}, {pipeline_mode = #tpu.pipeline_mode<synchronous>, transform_indices = @transform_3, window_bounds = array<i64: 1, 32>}, {pipeline_mode = #tpu.pipeline_mode<synchronous>, transform_indices = @transform_4, window_bounds = array<i64: 32, 8>}, {pipeline_mode = #tpu.pipeline_mode<synchronous>, transform_indices = @transform_5, window_bounds = array<i64: 1, 8>}, {pipeline_mode = #tpu.pipeline_mode<synchronous>, transform_indices = @transform_6, window_bounds = array<i64: 32, 8>}, {pipeline_mode = #tpu.pipeline_mode<synchronous>, transform_indices = @transform_7, window_bounds = array<i64: 1, 8>}, {transform_indices = @transform_8, window_bounds = array<i64: 1, 16, 8>}, {transform_indices = @transform_9, window_bounds = array<i64: 1, 16, 8>}]} {
    %c0 = arith.constant 0 : index
    %c0_0 = arith.constant 0 : index
    %c0_1 = arith.constant 0 : index
    %0 = vector.load %arg2[%c0, %c0_0, %c0_1] : memref<1x16x32xf32, #tpu.memory_space<vmem>>, vector<1x16x32xf32>
    %1 = vector.shape_cast %0 : vector<1x16x32xf32> to vector<16x32xf32>
    %cst = arith.constant dense<0.000000e+00> : vector<16xf32>
    %2 = vector.multi_reduction <add>, %1, %cst [1] : vector<16x32xf32> to vector<16xf32>
    %3 = vector.shape_cast %2 : vector<16xf32> to vector<16x1xf32>
    %cst_2 = arith.constant 3.200000e+01 : f32
    %4 = vector.broadcast %cst_2 : f32 to vector<16x1xf32>
    %5 = arith.divf %3, %4 : vector<16x1xf32>
    %6 = vector.broadcast %5 : vector<16x1xf32> to vector<16x32xf32>
    %7 = arith.subf %1, %6 : vector<16x32xf32>
    %8 = arith.mulf %7, %7 : vector<16x32xf32>
    %cst_3 = arith.constant dense<0.000000e+00> : vector<16xf32>
    %9 = vector.multi_reduction <add>, %8, %cst_3 [1] : vector<16x32xf32> to vector<16xf32>
    %10 = vector.shape_cast %9 : vector<16xf32> to vector<16x1xf32>
    %cst_4 = arith.constant 3.200000e+01 : f32
    %11 = vector.broadcast %cst_4 : f32 to vector<16x1xf32>
    %12 = arith.divf %10, %11 : vector<16x1xf32>
    %cst_5 = arith.constant 9.99999974E-6 : f32
    %13 = vector.broadcast %cst_5 : f32 to vector<16x1xf32>
    %14 = arith.addf %12, %13 : vector<16x1xf32>
    %15 = math.rsqrt %14 : vector<16x1xf32>
    %16 = vector.broadcast %15 : vector<16x1xf32> to vector<16x32xf32>
    %17 = arith.mulf %7, %16 : vector<16x32xf32>
    %c0_6 = arith.constant 0 : index
    %c0_7 = arith.constant 0 : index
    %18 = vector.load %arg4[%c0_6, %c0_7] : memref<1x32xf32, #tpu.memory_space<vmem>>, vector<1x32xf32>
    %19 = vector.broadcast %18 : vector<1x32xf32> to vector<16x32xf32>
    %20 = arith.mulf %17, %19 : vector<16x32xf32>
    %c0_8 = arith.constant 0 : index
    %c0_9 = arith.constant 0 : index
    %21 = vector.load %arg5[%c0_8, %c0_9] : memref<1x32xf32, #tpu.memory_space<vmem>>, vector<1x32xf32>
    %22 = vector.broadcast %21 : vector<1x32xf32> to vector<16x32xf32>
    %23 = arith.addf %20, %22 : vector<16x32xf32>
    %c0_10 = arith.constant 0 : index
    %c0_11 = arith.constant 0 : index
    %c0_12 = arith.constant 0 : index
    %24 = vector.load %arg3[%c0_10, %c0_11, %c0_12] : memref<1x16x1xf32, #tpu.memory_space<vmem>>, vector<1x16x1xf32>
    %25 = vector.shape_cast %24 : vector<1x16x1xf32> to vector<16x1xf32>
    %c0_13 = arith.constant 0 : index
    %c0_14 = arith.constant 0 : index
    %26 = vector.load %arg6[%c0_13, %c0_14] : memref<32x8xf32, #tpu.memory_space<vmem>>, vector<32x8xf32>
    %cst_15 = arith.constant dense<0.000000e+00> : vector<16x8xf32>
    %27 = tpu.matmul %23, %26, %cst_15 {dimension_numbers = #tpu.dot_dimension_numbers<[1], [0], [0], [1], [0, 0, 1, 1], [], []>} : vector<16x32xf32>, vector<32x8xf32>, vector<16x8xf32> -> vector<16x8xf32>
    %c0_16 = arith.constant 0 : index
    %c0_17 = arith.constant 0 : index
    %28 = vector.load %arg7[%c0_16, %c0_17] : memref<1x8xf32, #tpu.memory_space<vmem>>, vector<1x8xf32>
    %29 = vector.broadcast %28 : vector<1x8xf32> to vector<16x8xf32>
    %30 = arith.addf %27, %29 : vector<16x8xf32>
    %31 = vector.broadcast %25 : vector<16x1xf32> to vector<16x8xf32>
    %32 = arith.mulf %30, %31 : vector<16x8xf32>
    %c0_18 = arith.constant 0 : index
    %c0_19 = arith.constant 0 : index
    %33 = vector.load %arg8[%c0_18, %c0_19] : memref<32x8xf32, #tpu.memory_space<vmem>>, vector<32x8xf32>
    %cst_20 = arith.constant dense<0.000000e+00> : vector<16x8xf32>
    %34 = tpu.matmul %23, %33, %cst_20 {dimension_numbers = #tpu.dot_dimension_numbers<[1], [0], [0], [1], [0, 0, 1, 1], [], []>} : vector<16x32xf32>, vector<32x8xf32>, vector<16x8xf32> -> vector<16x8xf32>
    %c0_21 = arith.constant 0 : index
    %c0_22 = arith.constant 0 : index
    %35 = vector.load %arg9[%c0_21, %c0_22] : memref<1x8xf32, #tpu.memory_space<vmem>>, vector<1x8xf32>
    %36 = vector.broadcast %35 : vector<1x8xf32> to vector<16x8xf32>
    %37 = arith.addf %34, %36 : vector<16x8xf32>
    %38 = vector.broadcast %25 : vector<16x1xf32> to vector<16x8xf32>
    %39 = arith.mulf %37, %38 : vector<16x8xf32>
    %40 = arith.truncf %32 : vector<16x8xf32> to vector<16x8xbf16>
    %c0_23 = arith.constant 0 : index
    %c0_24 = arith.constant 0 : index
    %c0_25 = arith.constant 0 : index
    %41 = vector.load %arg10[%c0_23, %c0_24, %c0_25] : memref<1x16x8xbf16, #tpu.memory_space<vmem>>, vector<1x16x8xbf16>
    %42 = vector.shape_cast %41 : vector<1x16x8xbf16> to vector<16x8xbf16>
    %43 = vector.shape_cast %40 : vector<16x8xbf16> to vector<1x16x8xbf16>
    tpu.vector_store %arg10[%c0_23, %c0_24, %c0_25], %43 {strides = array<i32>} : memref<1x16x8xbf16, #tpu.memory_space<vmem>>, vector<1x16x8xbf16>,
    %44 = arith.truncf %39 : vector<16x8xf32> to vector<16x8xbf16>
    %c0_26 = arith.constant 0 : index
    %c0_27 = arith.constant 0 : index
    %c0_28 = arith.constant 0 : index
    %45 = vector.load %arg11[%c0_26, %c0_27, %c0_28] : memref<1x16x8xbf16, #tpu.memory_space<vmem>>, vector<1x16x8xbf16>
    %46 = vector.shape_cast %45 : vector<1x16x8xbf16> to vector<16x8xbf16>
    %47 = vector.shape_cast %44 : vector<16x8xbf16> to vector<1x16x8xbf16>
    tpu.vector_store %arg11[%c0_26, %c0_27, %c0_28], %47 {strides = array<i32>} : memref<1x16x8xbf16, #tpu.memory_space<vmem>>, vector<1x16x8xbf16>,
    return
  }
  func.func @transform_0(%arg0: i32, %arg1: i32) -> (i32, i32, i32) {
    %c0_i32 = arith.constant 0 : i32
    %c0_i32_0 = arith.constant 0 : i32
    return %arg0, %arg1, %c0_i32 : i32, i32, i32
  }
  func.func @transform_1(%arg0: i32, %arg1: i32) -> (i32, i32, i32) {
    %c0_i32 = arith.constant 0 : i32
    %c0_i32_0 = arith.constant 0 : i32
    return %arg0, %arg1, %c0_i32 : i32, i32, i32
  }
  func.func @transform_2(%arg0: i32, %arg1: i32) -> (i32, i32) {
    %c0_i32 = arith.constant 0 : i32
    %c0_i32_0 = arith.constant 0 : i32
    %c0_i32_1 = arith.constant 0 : i32
    return %c0_i32, %c0_i32_0 : i32, i32
  }
  func.func @transform_3(%arg0: i32, %arg1: i32) -> (i32, i32) {
    %c0_i32 = arith.constant 0 : i32
    %c0_i32_0 = arith.constant 0 : i32
    %c0_i32_1 = arith.constant 0 : i32
    return %c0_i32, %c0_i32_0 : i32, i32
  }
  func.func @transform_4(%arg0: i32, %arg1: i32) -> (i32, i32) {
    %c0_i32 = arith.constant 0 : i32
    %c0_i32_0 = arith.constant 0 : i32
    %c0_i32_1 = arith.constant 0 : i32
    return %c0_i32, %c0_i32_0 : i32, i32
  }
  func.func @transform_5(%arg0: i32, %arg1: i32) -> (i32, i32) {
    %c0_i32 = arith.constant 0 : i32
    %c0_i32_0 = arith.constant 0 : i32
    %c0_i32_1 = arith.constant 0 : i32
    return %c0_i32, %c0_i32_0 : i32, i32
  }
  func.func @transform_6(%arg0: i32, %arg1: i32) -> (i32, i32) {
    %c0_i32 = arith.constant 0 : i32
    %c0_i32_0 = arith.constant 0 : i32
    %c0_i32_1 = arith.constant 0 : i32
    return %c0_i32, %c0_i32_0 : i32, i32
  }
  func.func @transform_7(%arg0: i32, %arg1: i32) -> (i32, i32) {
    %c0_i32 = arith.constant 0 : i32
    %c0_i32_0 = arith.constant 0 : i32
    %c0_i32_1 = arith.constant 0 : i32
    return %c0_i32, %c0_i32_0 : i32, i32
  }
  func.func @transform_8(%arg0: i32, %arg1: i32) -> (i32, i32, i32) {
    %c0_i32 = arith.constant 0 : i32
    %c0_i32_0 = arith.constant 0 : i32
    return %arg0, %arg1, %c0_i32 : i32, i32, i32
  }
  func.func @transform_9(%arg0: i32, %arg1: i32) -> (i32, i32, i32) {
    %c0_i32 = arith.constant 0 : i32
    %c0_i32_0 = arith.constant 0 : i32
    return %arg0, %arg1, %c0_i32 : i32, i32, i32
  }
}

</mosaic_0001>

<llo_original>
// kernel: tpu_custom_call.1
$region0: #{tpu_custom_call.1}
  #allocation0 [shape = 'u32[]', space=smem, size = 0x4, offset = 0x4, fixed_abs, tag = 'smem constant byte address 0x4 - core index']
  #allocation1 [shape = 'u32[144,128]{1,0:T(1,128)}', space=vmem, size = 0x12000, scoped, tag = 'internal scratch']
  %s0 = inlined_call_operand.vmem [shape: f32[8,16,32], index: 0, kind: input, shape index: {}]
  %s1 = inlined_call_operand.vmem [shape: f32[8,16,1], index: 1, kind: input, shape index: {}]
  %s2 = inlined_call_operand.vmem [shape: f32[1,32], index: 2, kind: input, shape index: {}]
  %s3 = inlined_call_operand.vmem [shape: f32[1,32], index: 3, kind: input, shape index: {}]
  %s4 = inlined_call_operand.vmem [shape: f32[32,8], index: 4, kind: input, shape index: {}]
  %s5 = inlined_call_operand.vmem [shape: f32[1,8], index: 5, kind: input, shape index: {}]
  %s6 = inlined_call_operand.vmem [shape: f32[32,8], index: 6, kind: input, shape index: {}]
  %s7 = inlined_call_operand.vmem [shape: f32[1,8], index: 7, kind: input, shape index: {}]
  %s8 = inlined_call_operand.vmem [shape: bf16[8,16,8], index: 8, kind: output, shape index: {0}]
  %s9 = inlined_call_operand.vmem [shape: bf16[8,16,8], index: 9, kind: output, shape index: {1}]
  %10 = xla_tuple %s8, %s9
  %s11 = sld [smem:[#allocation0]]
  $region73: #{tpu_custom_call.1} parent=0
    _
  %s13 = ssub.s32 1, %s11
  %s14 = scalar_select 0, %s13, %s11
  loop: start=0, step=1, limit=10
  $region2: #{tpu_custom_call.1} parent=0 // loop_pre_header
    _
  $region3: #{tpu_custom_call.1} parent=0 // loop_header
    %s16 = sphi 0, %s20
    %p17 = scmp.ge.s32.totalorder %s16, 10
    %s23 = sphi 0, %s35
    %s24 = sphi 0, %s31
    %s25 = sphi 0, %s23
    %s26 = sphi 0, %s24
    %s27 = sphi 0, %s25
    %s28 = sphi 0, %s26
    %s40 = sphi 0, %s42
    %s43 = sphi 0, %s40
    %s44 = sphi 0, %s43
    %s60 = sphi 0, %s44
    %s68 = sphi 0, %s70
    %s71 = sphi 0, %s68
    %s72 = sphi 0, %s71
    %s88 = sphi 0, %s72
    %s92 = sphi 0, %s92
    %s94 = sphi 0, %s92
    %s95 = sphi 0, %s94
    %s109 = sphi 0, %s95
    %s113 = sphi 0, %s113
    %s115 = sphi 0, %s113
    %s116 = sphi 0, %s115
    %s130 = sphi 0, %s116
    %s134 = sphi 0, %s134
    %s136 = sphi 0, %s134
    %s137 = sphi 0, %s136
    %s151 = sphi 0, %s137
    %s155 = sphi 0, %s155
    %s157 = sphi 0, %s155
    %s158 = sphi 0, %s157
    %s172 = sphi 0, %s158
    %s176 = sphi 0, %s176
    %s178 = sphi 0, %s176
    %s179 = sphi 0, %s178
    %s193 = sphi 0, %s179
    %s197 = sphi 0, %s197
    %s199 = sphi 0, %s197
    %s200 = sphi 0, %s199
    %s214 = sphi 0, %s200
    %s222 = sphi 0, %s224
    %s225 = sphi 0, %s222
    %s226 = sphi 0, %s225
    %s242 = sphi 0, %s226
    %s250 = sphi 0, %s252
    %s253 = sphi 0, %s250
    %s254 = sphi 0, %s253
    %s270 = sphi 0, %s254
  $region4: #{tpu_custom_call.1} parent=0 // loop_header_branch
    %19 = sbr.rel (%p17) target = $region8
  $region5: #{tpu_custom_call.1} parent=0 // loop_body
    %s21 = ssub.s32 %s16, 1
    %s22 = ssub.s32 %s16, 2
    %s29 = sadd.s32 1, %s24
    %p30 = scmp.ge.s32.totalorder %s29, 1
    %s31 = scalar_select %p30, 0, %s29
    %s32 = sadd.s32 1, %s23
    %s33 = scalar_select %p30, %s32, %s23
    %p34 = scmp.ge.s32.totalorder %s33, 8
    %s35 = scalar_select %p34, 0, %s33
    %s36 = ssub.s32 %s23, %s35
    %s37 = ssub.s32 %s24, %s31
    %s38 = sor.u32 %s36, %s37
    %p39 = scmp.eq.s32.totalorder %s38, 0
    %s41 = sadd.s32 %s40, 1
    %s42 = scalar_select %p39, %s40, %s41
    %p45 = pneg %p39
    %p46 = scmp.eq.s32.totalorder %s16, 7
    %p47 = por %p45, %p46
    %p48 = scmp.ne.s32.totalorder %s40, %s43
    %p49 = scmp.eq.s32.totalorder %s16, 0
    %p50 = por %p48, %p49
    %p51 = scmp.ne.s32.totalorder %s40, %s43
    %p52 = scmp.eq.s32.totalorder %s21, 7
    %p53 = por %p51, %p52
    %p54 = scmp.ne.s32.totalorder %s43, %s44
    %p55 = scmp.eq.s32.totalorder %s21, 0
    %p56 = por %p54, %p55
    %p57 = scmp.ne.s32.totalorder %s43, %s44
    %p58 = scmp.eq.s32.totalorder %s22, 7
    %p59 = por %p57, %p58
    %p61 = scmp.ne.s32.totalorder %s44, %s60
    %p62 = scmp.eq.s32.totalorder %s22, 0
    %p63 = por %p61, %p62
    %s64 = ssub.s32 %s23, %s35
    %s65 = ssub.s32 %s24, %s31
    %s66 = sor.u32 %s64, %s65
    %p67 = scmp.eq.s32.totalorder %s66, 0
    %s69 = sadd.s32 %s68, 1
    %s70 = scalar_select %p67, %s68, %s69
    %p73 = pneg %p67
    %p74 = scmp.eq.s32.totalorder %s16, 7
    %p75 = por %p73, %p74
    %p76 = scmp.ne.s32.totalorder %s68, %s71
    %p77 = scmp.eq.s32.totalorder %s16, 0
    %p78 = por %p76, %p77
    %p79 = scmp.ne.s32.totalorder %s68, %s71
    %p80 = scmp.eq.s32.totalorder %s21, 7
    %p81 = por %p79, %p80
    %p82 = scmp.ne.s32.totalorder %s71, %s72
    %p83 = scmp.eq.s32.totalorder %s21, 0
    %p84 = por %p82, %p83
    %p85 = scmp.ne.s32.totalorder %s71, %s72
    %p86 = scmp.eq.s32.totalorder %s22, 7
    %p87 = por %p85, %p86
    %p89 = scmp.ne.s32.totalorder %s72, %s88
    %p90 = scmp.eq.s32.totalorder %s22, 0
    %p91 = por %p89, %p90
    %s93 = sadd.s32 %s92, 1
    %p96 = scmp.eq.s32.totalorder %s16, 7
    %p97 = scmp.ne.s32.totalorder %s92, %s94
    %p98 = scmp.eq.s32.totalorder %s16, 0
    %p99 = por %p97, %p98
    %p100 = scmp.ne.s32.totalorder %s92, %s94
    %p101 = scmp.eq.s32.totalorder %s21, 7
    %p102 = por %p100, %p101
    %p103 = scmp.ne.s32.totalorder %s94, %s95
    %p104 = scmp.eq.s32.totalorder %s21, 0
    %p105 = por %p103, %p104
    %p106 = scmp.ne.s32.totalorder %s94, %s95
    %p107 = scmp.eq.s32.totalorder %s22, 7
    %p108 = por %p106, %p107
    %p110 = scmp.ne.s32.totalorder %s95, %s109
    %p111 = scmp.eq.s32.totalorder %s22, 0
    %p112 = por %p110, %p111
    %s114 = sadd.s32 %s113, 1
    %p117 = scmp.eq.s32.totalorder %s16, 7
    %p118 = scmp.ne.s32.totalorder %s113, %s115
    %p119 = scmp.eq.s32.totalorder %s16, 0
    %p120 = por %p118, %p119
    %p121 = scmp.ne.s32.totalorder %s113, %s115
    %p122 = scmp.eq.s32.totalorder %s21, 7
    %p123 = por %p121, %p122
    %p124 = scmp.ne.s32.totalorder %s115, %s116
    %p125 = scmp.eq.s32.totalorder %s21, 0
    %p126 = por %p124, %p125
    %p127 = scmp.ne.s32.totalorder %s115, %s116
    %p128 = scmp.eq.s32.totalorder %s22, 7
    %p129 = por %p127, %p128
    %p131 = scmp.ne.s32.totalorder %s116, %s130
    %p132 = scmp.eq.s32.totalorder %s22, 0
    %p133 = por %p131, %p132
    %s135 = sadd.s32 %s134, 1
    %p138 = scmp.eq.s32.totalorder %s16, 7
    %p139 = scmp.ne.s32.totalorder %s134, %s136
    %p140 = scmp.eq.s32.totalorder %s16, 0
    %p141 = por %p139, %p140
    %p142 = scmp.ne.s32.totalorder %s134, %s136
    %p143 = scmp.eq.s32.totalorder %s21, 7
    %p144 = por %p142, %p143
    %p145 = scmp.ne.s32.totalorder %s136, %s137
    %p146 = scmp.eq.s32.totalorder %s21, 0
    %p147 = por %p145, %p146
    %p148 = scmp.ne.s32.totalorder %s136, %s137
    %p149 = scmp.eq.s32.totalorder %s22, 7
    %p150 = por %p148, %p149
    %p152 = scmp.ne.s32.totalorder %s137, %s151
    %p153 = scmp.eq.s32.totalorder %s22, 0
    %p154 = por %p152, %p153
    %s156 = sadd.s32 %s155, 1
    %p159 = scmp.eq.s32.totalorder %s16, 7
    %p160 = scmp.ne.s32.totalorder %s155, %s157
    %p161 = scmp.eq.s32.totalorder %s16, 0
    %p162 = por %p160, %p161
    %p163 = scmp.ne.s32.totalorder %s155, %s157
    %p164 = scmp.eq.s32.totalorder %s21, 7
    %p165 = por %p163, %p164
    %p166 = scmp.ne.s32.totalorder %s157, %s158
    %p167 = scmp.eq.s32.totalorder %s21, 0
    %p168 = por %p166, %p167
    %p169 = scmp.ne.s32.totalorder %s157, %s158
    %p170 = scmp.eq.s32.totalorder %s22, 7
    %p171 = por %p169, %p170
    %p173 = scmp.ne.s32.totalorder %s158, %s172
    %p174 = scmp.eq.s32.totalorder %s22, 0
    %p175 = por %p173, %p174
    %s177 = sadd.s32 %s176, 1
    %p180 = scmp.eq.s32.totalorder %s16, 7
    %p181 = scmp.ne.s32.totalorder %s176, %s178
    %p182 = scmp.eq.s32.totalorder %s16, 0
    %p183 = por %p181, %p182
    %p184 = scmp.ne.s32.totalorder %s176, %s178
    %p185 = scmp.eq.s32.totalorder %s21, 7
    %p186 = por %p184, %p185
    %p187 = scmp.ne.s32.totalorder %s178, %s179
    %p188 = scmp.eq.s32.totalorder %s21, 0
    %p189 = por %p187, %p188
    %p190 = scmp.ne.s32.totalorder %s178, %s179
    %p191 = scmp.eq.s32.totalorder %s22, 7
    %p192 = por %p190, %p191
    %p194 = scmp.ne.s32.totalorder %s179, %s193
    %p195 = scmp.eq.s32.totalorder %s22, 0
    %p196 = por %p194, %p195
    %s198 = sadd.s32 %s197, 1
    %p201 = scmp.eq.s32.totalorder %s16, 7
    %p202 = scmp.ne.s32.totalorder %s197, %s199
    %p203 = scmp.eq.s32.totalorder %s16, 0
    %p204 = por %p202, %p203
    %p205 = scmp.ne.s32.totalorder %s197, %s199
    %p206 = scmp.eq.s32.totalorder %s21, 7
    %p207 = por %p205, %p206
    %p208 = scmp.ne.s32.totalorder %s199, %s200
    %p209 = scmp.eq.s32.totalorder %s21, 0
    %p210 = por %p208, %p209
    %p211 = scmp.ne.s32.totalorder %s199, %s200
    %p212 = scmp.eq.s32.totalorder %s22, 7
    %p213 = por %p211, %p212
    %p215 = scmp.ne.s32.totalorder %s200, %s214
    %p216 = scmp.eq.s32.totalorder %s22, 0
    %p217 = por %p215, %p216
    %s218 = ssub.s32 %s23, %s35
    %s219 = ssub.s32 %s24, %s31
    %s220 = sor.u32 %s218, %s219
    %p221 = scmp.eq.s32.totalorder %s220, 0
    %s223 = sadd.s32 %s222, 1
    %s224 = scalar_select %p221, %s222, %s223
    %p227 = pneg %p221
    %p228 = scmp.eq.s32.totalorder %s16, 7
    %p229 = por %p227, %p228
    %p230 = scmp.ne.s32.totalorder %s222, %s225
    %p231 = scmp.eq.s32.totalorder %s16, 0
    %p232 = por %p230, %p231
    %p233 = scmp.ne.s32.totalorder %s222, %s225
    %p234 = scmp.eq.s32.totalorder %s21, 7
    %p235 = por %p233, %p234
    %p236 = scmp.ne.s32.totalorder %s225, %s226
    %p237 = scmp.eq.s32.totalorder %s21, 0
    %p238 = por %p236, %p237
    %p239 = scmp.ne.s32.totalorder %s225, %s226
    %p240 = scmp.eq.s32.totalorder %s22, 7
    %p241 = por %p239, %p240
    %p243 = scmp.ne.s32.totalorder %s226, %s242
    %p244 = scmp.eq.s32.totalorder %s22, 0
    %p245 = por %p243, %p244
    %s246 = ssub.s32 %s23, %s35
    %s247 = ssub.s32 %s24, %s31
    %s248 = sor.u32 %s246, %s247
    %p249 = scmp.eq.s32.totalorder %s248, 0
    %s251 = sadd.s32 %s250, 1
    %s252 = scalar_select %p249, %s250, %s251
    %p255 = pneg %p249
    %p256 = scmp.eq.s32.totalorder %s16, 7
    %p257 = por %p255, %p256
    %p258 = scmp.ne.s32.totalorder %s250, %s253
    %p259 = scmp.eq.s32.totalorder %s16, 0
    %p260 = por %p258, %p259
    %p261 = scmp.ne.s32.totalorder %s250, %s253
    %p262 = scmp.eq.s32.totalorder %s21, 7
    %p263 = por %p261, %p262
    %p264 = scmp.ne.s32.totalorder %s253, %s254
    %p265 = scmp.eq.s32.totalorder %s21, 0
    %p266 = por %p264, %p265
    %p267 = scmp.ne.s32.totalorder %s253, %s254
    %p268 = scmp.eq.s32.totalorder %s22, 7
    %p269 = por %p267, %p268
    %p271 = scmp.ne.s32.totalorder %s254, %s270
    %p272 = scmp.eq.s32.totalorder %s22, 0
    %p273 = por %p271, %p272
    %p274 = scmp.le.s32.totalorder 1, %s16
    %p275 = scmp.lt.s32.totalorder %s16, 9
    %p276 = pnand %p274, %p275
    %p277 = pneg %p276
    // Predicated region
    $region9: #{tpu_custom_call.1} parent=5 // pred_check
      _
    $region10: #{tpu_custom_call.1} parent=5 // pred_check_branch
      %279 = sbr.rel (%p276) target = $region12
    $region11: #{tpu_custom_call.1} parent=5 // pred_region
      %s280 = ssub.s32 %s16, 1
      // Predicated region
      $region13: #{tpu_custom_call.1} parent=11 // pred_check
        %p281 = pneg %p105
      $region14: #{tpu_custom_call.1} parent=11 // pred_check_branch
        %283 = sbr.rel (%p281) target = $region16
      $region15: #{tpu_custom_call.1} parent=11 // pred_region
        _
      $region16: #{tpu_custom_call.1} parent=11 // pred_fallthru
        _
      // Predicated region
      $region17: #{tpu_custom_call.1} parent=11 // pred_check
        %p284 = pneg %p126
      $region18: #{tpu_custom_call.1} parent=11 // pred_check_branch
        %286 = sbr.rel (%p284) target = $region20
      $region19: #{tpu_custom_call.1} parent=11 // pred_region
        _
      $region20: #{tpu_custom_call.1} parent=11 // pred_fallthru
        _
      // Predicated region
      $region21: #{tpu_custom_call.1} parent=11 // pred_check
        %p287 = pneg %p147
      $region22: #{tpu_custom_call.1} parent=11 // pred_check_branch
        %289 = sbr.rel (%p287) target = $region24
      $region23: #{tpu_custom_call.1} parent=11 // pred_region
        _
      $region24: #{tpu_custom_call.1} parent=11 // pred_fallthru
        _
      // Predicated region
      $region25: #{tpu_custom_call.1} parent=11 // pred_check
        %p290 = pneg %p168
      $region26: #{tpu_custom_call.1} parent=11 // pred_check_branch
        %292 = sbr.rel (%p290) target = $region28
      $region27: #{tpu_custom_call.1} parent=11 // pred_region
        _
      $region28: #{tpu_custom_call.1} parent=11 // pred_fallthru
        _
      // Predicated region
      $region29: #{tpu_custom_call.1} parent=11 // pred_check
        %p293 = pneg %p189
      $region30: #{tpu_custom_call.1} parent=11 // pred_check_branch
        %295 = sbr.rel (%p293) target = $region32
      $region31: #{tpu_custom_call.1} parent=11 // pred_region
        _
      $region32: #{tpu_custom_call.1} parent=11 // pred_fallthru
        _
      // Predicated region
      $region33: #{tpu_custom_call.1} parent=11 // pred_check
        %p296 = pneg %p210
      $region34: #{tpu_custom_call.1} parent=11 // pred_check_branch
        %298 = sbr.rel (%p296) target = $region36
      $region35: #{tpu_custom_call.1} parent=11 // pred_region
        _
      $region36: #{tpu_custom_call.1} parent=11 // pred_fallthru
        _
    $region12: #{tpu_custom_call.1} parent=5 // pred_fallthru
      _
    %p299 = scmp.lt.s32.totalorder %s16, 8
    // Predicated region
    $region37: #{tpu_custom_call.1} parent=5 // pred_check
      %p300 = pneg %p299
    $region38: #{tpu_custom_call.1} parent=5 // pred_check_branch
      %302 = sbr.rel (%p300) target = $region40
    $region39: #{tpu_custom_call.1} parent=5 // pred_region
      // Predicated region
      $region41: #{tpu_custom_call.1} parent=39 // pred_check
        %p303 = pneg %p50
      $region42: #{tpu_custom_call.1} parent=39 // pred_check_branch
        %305 = sbr.rel (%p303) target = $region44
      $region43: #{tpu_custom_call.1} parent=39 // pred_region
        %s306 = smul.u32 2, %s24
        %p307 = scmp.lt.s32.totalorder %s23, 7
        %s308 = scalar_select %p307, %s23, 7
        %p309 = scmp.lt.s32.totalorder %s306, 1
        %s310 = scalar_select %p309, %s306, 1
        %s311 = smul.addr %s308, 2
        %s312 = sadd.s32 %s310, %s311
        %s313 = smul.addr %s312, 8
        %s314 = scalar_lea.vmem %s0, %s313
        %s315 = smul.u32 2, %s24
      $region44: #{tpu_custom_call.1} parent=39 // pred_fallthru
        _
      // Predicated region
      $region45: #{tpu_custom_call.1} parent=39 // pred_check
        %p316 = pneg %p78
      $region46: #{tpu_custom_call.1} parent=39 // pred_check_branch
        %318 = sbr.rel (%p316) target = $region48
      $region47: #{tpu_custom_call.1} parent=39 // pred_region
        %s319 = smul.u32 2, %s24
        %p320 = scmp.lt.s32.totalorder %s23, 7
        %s321 = scalar_select %p320, %s23, 7
        %p322 = scmp.lt.s32.totalorder %s319, 1
        %s323 = scalar_select %p322, %s319, 1
        %s324 = smul.addr %s321, 2
        %s325 = sadd.s32 %s323, %s324
        %s326 = smul.addr %s325, 8
        %s327 = scalar_lea.vmem %s1, %s326
        %s328 = smul.u32 2, %s24
      $region48: #{tpu_custom_call.1} parent=39 // pred_fallthru
        _
    $region40: #{tpu_custom_call.1} parent=5 // pred_fallthru
      _
    %p329 = scmp.le.s32.totalorder 1, %s16
    %p330 = scmp.lt.s32.totalorder %s16, 9
    %p331 = pnand %p329, %p330
    %p332 = pneg %p331
    // Predicated region
    $region49: #{tpu_custom_call.1} parent=5 // pred_check
      _
    $region50: #{tpu_custom_call.1} parent=5 // pred_check_branch
      %334 = sbr.rel (%p331) target = $region52
    $region51: #{tpu_custom_call.1} parent=5 // pred_region
      %s335 = ssub.s32 %s16, 1
      %s336 = smul.u32 2, %s26
      %p337 = scmp.lt.s32.totalorder %s25, 7
      %s338 = scalar_select %p337, %s25, 7
      %p339 = scmp.lt.s32.totalorder %s336, 1
      %s340 = scalar_select %p339, %s336, 1
      %s341 = smul.addr %s338, 2
      %s342 = sadd.s32 %s340, %s341
      %s343 = smul.addr %s342, 8
      %s344 = scalar_lea.vmem %s0, %s343
      %p345 = pneg %p56
      %p346 = pneg %p53
      %s347 = smul.u32 2, %s26
      %p348 = scmp.lt.s32.totalorder %s25, 7
      %s349 = scalar_select %p348, %s25, 7
      %p350 = scmp.lt.s32.totalorder %s347, 1
      %s351 = scalar_select %p350, %s347, 1
      %s352 = smul.addr %s349, 2
      %s353 = sadd.s32 %s351, %s352
      %s354 = smul.addr %s353, 8
      %s355 = scalar_lea.vmem %s1, %s354
      %p356 = pneg %p84
      %p357 = pneg %p81
      %p358 = pneg %p105
      %p359 = pneg %p102
      %p360 = pneg %p126
      %p361 = pneg %p123
      %p362 = pneg %p147
      %p363 = pneg %p144
      %p364 = pneg %p168
      %p365 = pneg %p165
      %p366 = pneg %p189
      %p367 = pneg %p186
      %p368 = pneg %p210
      %p369 = pneg %p207
      %p370 = pneg %p238
      %p371 = pneg %p235
      %s372 = smul.u32 2, %s26
      %p373 = scmp.lt.s32.totalorder %s25, 7
      %s374 = scalar_select %p373, %s25, 7
      %p375 = scmp.lt.s32.totalorder %s372, 1
      %s376 = scalar_select %p375, %s372, 1
      %s377 = smul.addr %s374, 2
      %s378 = sadd.s32 %s376, %s377
      %s379 = smul.addr %s378, 4
      %s380 = scalar_lea.vmem %s8, %s379
      %p381 = pneg %p266
      %p382 = pneg %p263
      %s383 = smul.u32 2, %s26
      %p384 = scmp.lt.s32.totalorder %s25, 7
      %s385 = scalar_select %p384, %s25, 7
      %p386 = scmp.lt.s32.totalorder %s383, 1
      %s387 = scalar_select %p386, %s383, 1
      %s388 = smul.addr %s385, 2
      %s389 = sadd.s32 %s387, %s388
      %s390 = smul.addr %s389, 4
      %s391 = scalar_lea.vmem %s9, %s390
      %s392 = smul.u32 2, %s26
      %p393 = scmp.lt.s32.totalorder %s25, 7
      %s394 = scalar_select %p393, %s25, 7
      %p395 = scmp.lt.s32.totalorder %s392, 1
      %s396 = scalar_select %p395, %s392, 1
      %s397 = smul.addr %s394, 2
      %s398 = sadd.s32 %s396, %s397
      %s399 = smul.addr %s398, 8
      %s400 = scalar_lea.vmem %s0, %s399
      %s401 = smul.u32 2, %s26
      %s402 = smul.u32 2, %s26
      %p403 = scmp.lt.s32.totalorder %s25, 7
      %s404 = scalar_select %p403, %s25, 7
      %p405 = scmp.lt.s32.totalorder %s402, 1
      %s406 = scalar_select %p405, %s402, 1
      %s407 = smul.addr %s404, 2
      %s408 = sadd.s32 %s406, %s407
      %s409 = smul.addr %s408, 8
      %s410 = scalar_lea.vmem %s1, %s409
      %s411 = smul.u32 2, %s26
      %s412 = smul.u32 2, %s26
      %p413 = scmp.lt.s32.totalorder %s25, 7
      %s414 = scalar_select %p413, %s25, 7
      %p415 = scmp.lt.s32.totalorder %s412, 1
      %s416 = scalar_select %p415, %s412, 1
      %s417 = smul.addr %s414, 2
      %s418 = sadd.s32 %s416, %s417
      %s419 = smul.addr %s418, 4
      %s420 = scalar_lea.vmem %s8, %s419
      %s421 = smul.u32 2, %s26
      %s422 = smul.u32 2, %s26
      %p423 = scmp.lt.s32.totalorder %s25, 7
      %s424 = scalar_select %p423, %s25, 7
      %p425 = scmp.lt.s32.totalorder %s422, 1
      %s426 = scalar_select %p425, %s422, 1
      %s427 = smul.addr %s424, 2
      %s428 = sadd.s32 %s426, %s427
      %s429 = smul.addr %s428, 4
      %s430 = scalar_lea.vmem %s9, %s429
      %s431 = smul.u32 2, %s26
      %v432 = vld [vmem:[%s400] sm:$0xff]
      %v433 = vld [vmem:[%s400 + $0x8] sm:$0xff]
      %vm434 = vcmask 261120
      %v435 = vsel %vm434, %v432, 0.0
      %436 = vadd.xlane.f32.xlu0 %v435
      %v437 = vpop.xlane.xlu0 %436
      %v438 = vsel %vm434, %v433, 0.0
      %439 = vadd.xlane.f32.xlu0 %v438
      %v440 = vpop.xlane.xlu0 %439
      %v441 = vrcp.pop 32.0
      %v442 = vmul.f32 %v437, %v441
      %v443 = vmul.f32 %v440, %v441
      %v444 = vsub.f32 %v432, %v442
      %v445 = vsub.f32 %v433, %v443
      %v446 = vmul.f32 %v444, %v444
      %v447 = vmul.f32 %v445, %v445
      %v448 = vsel %vm434, %v446, 0.0
      %449 = vadd.xlane.f32.xlu0 %v448
      %v450 = vpop.xlane.xlu0 %449
      %v451 = vsel %vm434, %v447, 0.0
      %452 = vadd.xlane.f32.xlu0 %v451
      %v453 = vpop.xlane.xlu0 %452
      %v454 = vmul.f32 %v450, %v441
      %v455 = vmul.f32 %v453, %v441
      %v456 = vadd.f32 %v454, 1e-05
      %v457 = vadd.f32 %v455, 1e-05
      %v458 = vrsqrt.pop %v456
      %v459 = vrsqrt.pop %v457
      %v460 = vmul.f32 %v444, %v458
      %v461 = vmul.f32 %v445, %v459
      %v462 = vld [vmem:[%s2] sm:$0x1]
      %v464 = vlaneseq
      %v465 = vshrl.u32 %v464, 7
      %v466 = vsub.s32 0, %v465
      %v467 = vrot.slane %v462, %v466
      %v469 = vmul.f32 %v460, %v467
      %v470 = vmul.f32 %v461, %v467
      %v471 = vld [vmem:[%s3] sm:$0x1]
      %v473 = vlaneseq
      %v474 = vshrl.u32 %v473, 7
      %v475 = vsub.s32 0, %v474
      %v476 = vrot.slane %v471, %v475
      %v478 = vadd.f32 %v469, %v476
      %v479 = vadd.f32 %v470, %v476
      %v480 = vld [vmem:[%s410] sm:$0xff]
      %v481 = vld [vmem:[%s410 + $0x8] sm:$0xff]
      %v482 = vld [vmem:[%s4] sm:$0xff]
      %v483 = vld [vmem:[%s4 + $0x8] sm:$0xff]
      %v484 = vld [vmem:[%s4 + $0x10] sm:$0xff]
      %v485 = vld [vmem:[%s4 + $0x18] sm:$0xff]
      %v486 = vld [vmem:[%s5] sm:$0x1]
      %v488 = vlaneseq
      %v489 = vshrl.u32 %v488, 7
      %v490 = vsub.s32 0, %v489
      %v491 = vrot.slane %v486, %v490
      %v494 = vsel %vm434, %v478, 0
      %v497 = vsel %vm434, %v479, 0
      %499 = vmatprep.subr.mxu0 0.0
      %500 = vmatpush1.msra.mxu0 %v482
      %501 = vmatprep.subr.mxu0 0.0
      %502 = vmatpush1.msra.mxu0 %v483
      %503 = vmatprep.subr.mxu0 0.0
      %504 = vmatpush1.msra.mxu0 %v484
      %505 = vmatprep.subr.mxu0 0.0
      %506 = vmatpush1.msra.mxu0 %v485
      %507 = vmatprep.subr.mxu0 0.0
      %508 = vmatpush1.msra.mxu0 0.0
      %509 = vmatprep.subr.mxu0 0.0
      %510 = vmatpush1.msra.mxu0 0.0
      %511 = vmatprep.subr.mxu0 0.0
      %512 = vmatpush1.msra.mxu0 0.0
      %513 = vmatprep.subr.mxu0 0.0
      %514 = vmatpush1.msra.mxu0 0.0
      %515 = vmatprep.subr.mxu0 0.0
      %516 = vmatpush1.msra.mxu0 0.0
      %517 = vmatprep.subr.mxu0 0.0
      %518 = vmatpush1.msra.mxu0 0.0
      %519 = vmatprep.subr.mxu0 0.0
      %520 = vmatpush1.msra.mxu0 0.0
      %521 = vmatprep.subr.mxu0 0.0
      %522 = vmatpush1.msra.mxu0 0.0
      %523 = vmatprep.subr.mxu0 0.0
      %524 = vmatpush1.msra.mxu0 0.0
      %525 = vmatprep.subr.mxu0 0.0
      %526 = vmatpush1.msra.mxu0 0.0
      %527 = vmatprep.subr.mxu0 0.0
      %528 = vmatpush1.msra.mxu0 0.0
      %529 = vmatprep.subr.mxu0 0.0
      %530 = vmatpush1.msra.mxu0 0.0
      %531 = vmatprep.subr.mxu0 0.0
      %532 = vmatpush1.msra.mxu0 0.0
      %533 = vmatprep.subr.mxu0 0.0
      %534 = vmatpush1.msra.mxu0 0.0
      %535 = vmatprep.subr.mxu0 0.0
      %536 = vmatpush1.msra.mxu0 0.0
      %537 = vmatprep.subr.mxu0 0.0
      %538 = vmatpush1.msra.mxu0 0.0
      %539 = vmatprep.subr.mxu0 0.0
      %540 = vmatpush1.msra.mxu0 0.0
      %541 = vmatprep.subr.mxu0 0.0
      %542 = vmatpush1.msra.mxu0 0.0
      %543 = vmatprep.subr.mxu0 0.0
      %544 = vmatpush1.msra.mxu0 0.0
      %545 = vmatprep.subr.mxu0 0.0
      %546 = vmatpush1.msra.mxu0 0.0
      %547 = vmatprep.subr.mxu0 0.0
      %548 = vmatpush1.msra.mxu0 0.0
      %549 = vmatprep.subr.mxu0 0.0
      %550 = vmatpush1.msra.mxu0 0.0
      %551 = vmatprep.subr.mxu0 0.0
      %552 = vmatpush1.msra.mxu0 0.0
      %553 = vmatprep.subr.mxu0 0.0
      %554 = vmatpush1.msra.mxu0 0.0
      %555 = vmatprep.subr.mxu0 0.0
      %556 = vmatpush1.msra.mxu0 0.0
      %557 = vmatprep.subr.mxu0 0.0
      %558 = vmatpush1.msra.mxu0 0.0
      %559 = vmatprep.subr.mxu0 0.0
      %560 = vmatpush1.msra.mxu0 0.0
      %561 = vmatprep.subr.mxu0 0.0
      %562 = vmatpush1.msra.mxu0 0.0
      %563 = vmatprep.mubr.f32.mxu0 0.0
      %564 = vmatmul.mubr.f32.gmra.mrb[0].mxu0 %v494
      %v565 = vpop.f32.mrb[0].mxu0
      %v566 = vadd.f32 %v491, %v565
      %v567 = vpop.f32.mrb[0].mxu0
      %568 = vmatprep.mubr.f32.mxu0 0.0
      %569 = vmatmul.mubr.f32.gmra.mrb[0].mxu0 %v497
      %v570 = vpop.f32.mrb[0].mxu0
      %v571 = vadd.f32 %v491, %v570
      %v572 = vpop.f32.mrb[0].mxu0
      %573 = vdwg.mxu0
      %575 = vset.pattern.permute.xlu0 0
      %576 = vperm.xlu0 %575, %v480
      %v577 = vpop.permute.xlu0 %576
      %580 = vset.pattern.permute.xlu0 0
      %581 = vperm.xlu0 %580, %v481
      %v582 = vpop.permute.xlu0 %581
      %v584 = vmul.f32 %v566, %v577
      %v585 = vmul.f32 %v571, %v582
      %v586 = vld [vmem:[%s6] sm:$0xff]
      %v587 = vld [vmem:[%s6 + $0x8] sm:$0xff]
      %v588 = vld [vmem:[%s6 + $0x10] sm:$0xff]
      %v589 = vld [vmem:[%s6 + $0x18] sm:$0xff]
      %v590 = vld [vmem:[%s7] sm:$0x1]
      %v592 = vlaneseq
      %v593 = vshrl.u32 %v592, 7
      %v594 = vsub.s32 0, %v593
      %v595 = vrot.slane %v590, %v594
      %597 = vmatprep.subr.mxu0 0.0
      %598 = vmatpush1.msra.mxu0 %v586
      %599 = vmatprep.subr.mxu0 0.0
      %600 = vmatpush1.msra.mxu0 %v587
      %601 = vmatprep.subr.mxu0 0.0
      %602 = vmatpush1.msra.mxu0 %v588
      %603 = vmatprep.subr.mxu0 0.0
      %604 = vmatpush1.msra.mxu0 %v589
      %605 = vmatprep.subr.mxu0 0.0
      %606 = vmatpush1.msra.mxu0 0.0
      %607 = vmatprep.subr.mxu0 0.0
      %608 = vmatpush1.msra.mxu0 0.0
      %609 = vmatprep.subr.mxu0 0.0
      %610 = vmatpush1.msra.mxu0 0.0
      %611 = vmatprep.subr.mxu0 0.0
      %612 = vmatpush1.msra.mxu0 0.0
      %613 = vmatprep.subr.mxu0 0.0
      %614 = vmatpush1.msra.mxu0 0.0
      %615 = vmatprep.subr.mxu0 0.0
      %616 = vmatpush1.msra.mxu0 0.0
      %617 = vmatprep.subr.mxu0 0.0
      %618 = vmatpush1.msra.mxu0 0.0
      %619 = vmatprep.subr.mxu0 0.0
      %620 = vmatpush1.msra.mxu0 0.0
      %621 = vmatprep.subr.mxu0 0.0
      %622 = vmatpush1.msra.mxu0 0.0
      %623 = vmatprep.subr.mxu0 0.0
      %624 = vmatpush1.msra.mxu0 0.0
      %625 = vmatprep.subr.mxu0 0.0
      %626 = vmatpush1.msra.mxu0 0.0
      %627 = vmatprep.subr.mxu0 0.0
      %628 = vmatpush1.msra.mxu0 0.0
      %629 = vmatprep.subr.mxu0 0.0
      %630 = vmatpush1.msra.mxu0 0.0
      %631 = vmatprep.subr.mxu0 0.0
      %632 = vmatpush1.msra.mxu0 0.0
      %633 = vmatprep.subr.mxu0 0.0
      %634 = vmatpush1.msra.mxu0 0.0
      %635 = vmatprep.subr.mxu0 0.0
      %636 = vmatpush1.msra.mxu0 0.0
      %637 = vmatprep.subr.mxu0 0.0
      %638 = vmatpush1.msra.mxu0 0.0
      %639 = vmatprep.subr.mxu0 0.0
      %640 = vmatpush1.msra.mxu0 0.0
      %641 = vmatprep.subr.mxu0 0.0
      %642 = vmatpush1.msra.mxu0 0.0
      %643 = vmatprep.subr.mxu0 0.0
      %644 = vmatpush1.msra.mxu0 0.0
      %645 = vmatprep.subr.mxu0 0.0
      %646 = vmatpush1.msra.mxu0 0.0
      %647 = vmatprep.subr.mxu0 0.0
      %648 = vmatpush1.msra.mxu0 0.0
      %649 = vmatprep.subr.mxu0 0.0
      %650 = vmatpush1.msra.mxu0 0.0
      %651 = vmatprep.subr.mxu0 0.0
      %652 = vmatpush1.msra.mxu0 0.0
      %653 = vmatprep.subr.mxu0 0.0
      %654 = vmatpush1.msra.mxu0 0.0
      %655 = vmatprep.subr.mxu0 0.0
      %656 = vmatpush1.msra.mxu0 0.0
      %657 = vmatprep.subr.mxu0 0.0
      %658 = vmatpush1.msra.mxu0 0.0
      %659 = vmatprep.subr.mxu0 0.0
      %660 = vmatpush1.msra.mxu0 0.0
      %661 = vmatprep.mubr.f32.mxu0 0.0
      %662 = vmatmul.mubr.f32.gmra.mrb[0].mxu0 %v494
      %v663 = vpop.f32.mrb[0].mxu0
      %v664 = vadd.f32 %v595, %v663
      %v665 = vpop.f32.mrb[0].mxu0
      %666 = vmatprep.mubr.f32.mxu0 0.0
      %667 = vmatmul.mubr.f32.gmra.mrb[0].mxu0 %v497
      %v668 = vpop.f32.mrb[0].mxu0
      %v669 = vadd.f32 %v595, %v668
      %v670 = vpop.f32.mrb[0].mxu0
      %671 = vdwg.mxu0
      %v672 = vmul.f32 %v664, %v577
      %v673 = vmul.f32 %v669, %v582
      %v674 = vpack.c.bf16 %v585, %v584
      %v676 = vunpack.c.l.b16 %v674
      %v677 = vunpack.c.h.b16 %v674
      %v678 = vpack.c.b16 %v676, %v676
      %v679 = vpack.c.b16 %v677, %v677
      %vm682 = vcmask 60416
      %683 = vst.msk [vmem:[%s420] sm:$0xf] %vm682, %v678
      %684 = vst.msk [vmem:[%s420 + $0x4] sm:$0xf] %vm682, %v679
      %v685 = vpack.c.bf16 %v673, %v672
      %v687 = vunpack.c.l.b16 %v685
      %v688 = vunpack.c.h.b16 %v685
      %v689 = vpack.c.b16 %v687, %v687
      %v690 = vpack.c.b16 %v688, %v688
      %693 = vst.msk [vmem:[%s430] sm:$0xf] %vm682, %v689
      %694 = vst.msk [vmem:[%s430 + $0x4] sm:$0xf] %vm682, %v690
      %s695 = smul.u32 2, %s26
      %p696 = scmp.lt.s32.totalorder %s25, 7
      %s697 = scalar_select %p696, %s25, 7
      %p698 = scmp.lt.s32.totalorder %s695, 1
      %s699 = scalar_select %p698, %s695, 1
      %s700 = smul.addr %s697, 2
      %s701 = sadd.s32 %s699, %s700
      %s702 = smul.addr %s701, 4
      %s703 = scalar_lea.vmem %s8, %s702
      %s704 = smul.u32 2, %s26
      %p705 = scmp.lt.s32.totalorder %s25, 7
      %s706 = scalar_select %p705, %s25, 7
      %p707 = scmp.lt.s32.totalorder %s704, 1
      %s708 = scalar_select %p707, %s704, 1
      %s709 = smul.addr %s706, 2
      %s710 = sadd.s32 %s708, %s709
      %s711 = smul.addr %s710, 4
      %s712 = scalar_lea.vmem %s9, %s711
      // Predicated region
      $region53: #{tpu_custom_call.1} parent=51 // pred_check
        %p713 = pneg %p235
      $region54: #{tpu_custom_call.1} parent=51 // pred_check_branch
        %715 = sbr.rel (%p713) target = $region56
      $region55: #{tpu_custom_call.1} parent=51 // pred_region
        %s716 = smul.u32 2, %s26
      $region56: #{tpu_custom_call.1} parent=51 // pred_fallthru
        _
      // Predicated region
      $region57: #{tpu_custom_call.1} parent=51 // pred_check
        %p717 = pneg %p263
      $region58: #{tpu_custom_call.1} parent=51 // pred_check_branch
        %719 = sbr.rel (%p717) target = $region60
      $region59: #{tpu_custom_call.1} parent=51 // pred_region
        %s720 = smul.u32 2, %s26
      $region60: #{tpu_custom_call.1} parent=51 // pred_fallthru
        _
    $region52: #{tpu_custom_call.1} parent=5 // pred_fallthru
      _
    %p721 = scmp.le.s32.totalorder 2, %s16
    // Predicated region
    $region61: #{tpu_custom_call.1} parent=5 // pred_check
      %p722 = pneg %p721
    $region62: #{tpu_custom_call.1} parent=5 // pred_check_branch
      %724 = sbr.rel (%p722) target = $region64
    $region63: #{tpu_custom_call.1} parent=5 // pred_region
      %s725 = ssub.s32 %s16, 2
      // Predicated region
      $region65: #{tpu_custom_call.1} parent=63 // pred_check
        %p726 = pneg %p241
      $region66: #{tpu_custom_call.1} parent=63 // pred_check_branch
        %728 = sbr.rel (%p726) target = $region68
      $region67: #{tpu_custom_call.1} parent=63 // pred_region
        %s729 = smul.u32 2, %s28
        %p730 = scmp.lt.s32.totalorder %s27, 7
        %s731 = scalar_select %p730, %s27, 7
        %p732 = scmp.lt.s32.totalorder %s729, 1
        %s733 = scalar_select %p732, %s729, 1
        %s734 = smul.addr %s731, 2
        %s735 = sadd.s32 %s733, %s734
        %s736 = smul.addr %s735, 4
        %s737 = scalar_lea.vmem %s8, %s736
      $region68: #{tpu_custom_call.1} parent=63 // pred_fallthru
        _
      // Predicated region
      $region69: #{tpu_custom_call.1} parent=63 // pred_check
        %p738 = pneg %p269
      $region70: #{tpu_custom_call.1} parent=63 // pred_check_branch
        %740 = sbr.rel (%p738) target = $region72
      $region71: #{tpu_custom_call.1} parent=63 // pred_region
        %s741 = smul.u32 2, %s28
        %p742 = scmp.lt.s32.totalorder %s27, 7
        %s743 = scalar_select %p742, %s27, 7
        %p744 = scmp.lt.s32.totalorder %s741, 1
        %s745 = scalar_select %p744, %s741, 1
        %s746 = smul.addr %s743, 2
        %s747 = sadd.s32 %s745, %s746
        %s748 = smul.addr %s747, 4
        %s749 = scalar_lea.vmem %s9, %s748
      $region72: #{tpu_custom_call.1} parent=63 // pred_fallthru
        _
    $region64: #{tpu_custom_call.1} parent=5 // pred_fallthru
      _
  $region6: #{tpu_custom_call.1} parent=0 // loop_footer
    %s20 = sadd.s32 1, %s16
  $region7: #{tpu_custom_call.1} parent=0 // loop_footer_branch
    %15 = sbr.rel target = $region3
  $region8: #{tpu_custom_call.1} parent=0 // loop_exit
    _

</llo_original>
